<compile_context>
chip_gen: v6e
topology: v6e:2x2x1
jax: 0.10.0
libtpu: 0.0.40
codegen_flags: <defaults>
</compile_context>

<pallas_src>
import functools

import jax
import jax.numpy as jnp
from jax.experimental import pallas as pl
from jax.experimental.pallas import tpu as pltpu

_LANE = 128
_TARGET_BLOCKS = 8            # >= 3-4 blocks per v7x TensorCore -> pipelining
_MIN_BLOCK_BYTES = 512 * 1024


def _swish_kernel(x_ref, o_ref, *, compute_dtype):
    # Masked partial edge blocks read uninitialized pad data here; tanh of
    # garbage is benign because Pallas clips the writeback to the valid
    # region.  Do NOT "fix" this by padding the tensor (extra HBM passes).
    x = x_ref[...].astype(compute_dtype)
    sig = 0.5 * jnp.tanh(0.5 * x) + 0.5          # sigmoid via one EUP tanh
    o_ref[...] = (x * sig).astype(o_ref.dtype)


def _cdiv(a, b):
    return -(-a // b)


def _round_up(v, m):
    return _cdiv(v, m) * m


def _round_down(v, m):
    return (v // m) * m


def _vmem_capacity_bytes():
    try:
        cap = getattr(pltpu.get_tpu_info(), "vmem_capacity_bytes", None)
        if cap:
            return int(cap)
    except Exception:
        pass
    return 64 * 1024 * 1024   # conservative default: v7x per-TensorCore VMEM


def _native_bf16_compute():
    # v5e has no native bf16 VPU/EUP -> use f32 compute there (and on unknown
    # chips); bf16-native compute only on v6e/v7x.
    try:
        kind = jax.devices()[0].device_kind.lower()
    except Exception:
        return False
    return ("v6" in kind) or ("v7" in kind) or ("tpu7" in kind)


def _best_2d_view(shape, n):
    """Pick (rows, cols), rows*cols == n, maximizing lane/sublane density.

    Every candidate is an exact factorization of n, so the reshape is a
    layout-preserving bitcast (no extra HBM traffic)."""
    cands = set()
    for c in (4096, 2048, 1024, 512, 256, 128):   # lane-dense widths
        if n % c == 0:
            cands.add(c)
    p = 1
    for d in reversed(shape):                      # free suffix collapses
        p *= int(d)
        cands.add(p)
    cands.add(n)
    best_key, best_view = None, (1, n)
    for c in cands:
        if c <= 0 or n % c:
            continue
        r = n // c
        lane_eff = c / float(_LANE * _cdiv(c, _LANE))
        sub_eff = min(r, 8) / 8.0
        key = (lane_eff * sub_eff, c)              # tie-break: wider rows
        if best_key is None or key > best_key:
            best_key, best_view = key, (r, c)
    return best_view


def _choose_row_block(rows, row_bytes, block_bytes, sub):
    total = rows * row_bytes
    if total <= _MIN_BLOCK_BYTES or rows <= sub:
        return rows                                       # single block
    cap = _round_down(block_bytes // row_bytes, sub)      # VMEM byte budget
    want = _round_up(_cdiv(rows, _TARGET_BLOCKS), sub)    # ~8 grid steps
    floor = _round_up(_cdiv(_MIN_BLOCK_BYTES, row_bytes), sub)
    tr = min(cap, max(want, floor))
    return rows if tr >= rows else tr


def swish(x, *, block_bytes=None):
    """Elementwise swish via a tiled, lane-dense Pallas TPU kernel."""
    orig_shape, dtype = x.shape, x.dtype
    n = x.size
    if n == 0:
        return x

    itemsize = jnp.dtype(dtype).itemsize
    if dtype == jnp.bfloat16 and _native_bf16_compute():
        compute_dtype = jnp.bfloat16
    else:
        compute_dtype = jnp.float32

    # Per-generation VMEM budget: pipelined footprint = 4 x block (double
    # buffered in + out), kept at <= 80% of the scoped-VMEM limit, which is
    # itself <= half the physical VMEM of this chip generation.
    vmem_limit = min(_vmem_capacity_bytes() // 2, 48 * 1024 * 1024)
    max_block = max(_MIN_BLOCK_BYTES, (vmem_limit * 4 // 5) // 4)
    if block_bytes is None:
        block_bytes = min(6 * 1024 * 1024, max_block)
    else:
        block_bytes = max(_MIN_BLOCK_BYTES, min(int(block_bytes), max_block))

    rows, cols = _best_2d_view(orig_shape, n)
    x2d = x.reshape(rows, cols)           # bitcast under jit, no HBM traffic
    sub = max(8, 32 // itemsize)          # sublane packing: 8 f32, 16 bf16
    row_bytes = cols * itemsize

    if row_bytes * sub > block_bytes and cols > _LANE:
        # Very wide rows (rare): block the lane dim too; the partial last
        # column block is masked by Pallas.
        r_blk = rows if rows < sub else sub
        c_blk = _round_down(block_bytes // (r_blk * itemsize), _LANE)
        c_blk = cols if c_blk >= cols else max(_LANE, c_blk)
    else:
        c_blk = cols
        r_blk = _choose_row_block(rows, row_bytes, block_bytes, sub)

    grid = (_cdiv(rows, r_blk), _cdiv(cols, c_blk))

    out2d = pl.pallas_call(
        functools.partial(_swish_kernel, compute_dtype=compute_dtype),
        out_shape=jax.ShapeDtypeStruct((rows, cols), dtype),
        grid_spec=pltpu.PrefetchScalarGridSpec(
            num_scalar_prefetch=0,
            grid=grid,
            in_specs=[pl.BlockSpec((r_blk, c_blk), lambda i, j: (i, j))],
            out_specs=pl.BlockSpec((r_blk, c_blk), lambda i, j: (i, j)),
        ),
        compiler_params=pltpu.CompilerParams(
            dimension_semantics=("parallel", "parallel"),
            vmem_limit_bytes=vmem_limit,
        ),
    )(x2d)
    return out2d.reshape(orig_shape)


if __name__ == "__main__":
    swish_jit = jax.jit(swish)

    def ref_swish(v):
        vf = v.astype(jnp.float32)
        return vf * jax.nn.sigmoid(vf)

    # 1) canonical NCHW-like activation input (as used after conv layers)
    x = jax.random.normal(jax.random.PRNGKey(0), (2, 4, 16, 16), dtype=jnp.float32)
    out = jax.block_until_ready(swish_jit(x))
    assert out.shape == x.shape and out.dtype == x.dtype
    assert jnp.allclose(out, ref_swish(x), atol=1e-5, rtol=1e-5)

    # 2) bf16 input (tolerance test; bf16-native compute only on v6e/v7x)
    xb = jax.random.normal(jax.random.PRNGKey(1), (2, 4, 16, 16)).astype(jnp.bfloat16)
    outb = jax.block_until_ready(swish_jit(xb))
    assert outb.shape == xb.shape and outb.dtype == jnp.bfloat16
    assert jnp.allclose(outb.astype(jnp.float32), ref_swish(xb), atol=2e-2, rtol=2e-2)

    # 3) size not a multiple of 128 -> handled in-kernel, no extra HBM passes
    xt = jax.random.normal(jax.random.PRNGKey(2), (3, 5, 7), dtype=jnp.float32)
    outt = jax.block_until_ready(swish_jit(xt))
    assert outt.shape == xt.shape
    assert jnp.allclose(outt, ref_swish(xt), atol=1e-5, rtol=1e-5)

    # 4) multi-block grid with a masked partial last row block
    xm = jax.random.normal(jax.random.PRNGKey(3), (8, 64, 33, 33), dtype=jnp.float32)
    outm = jax.block_until_ready(swish_jit(xm))
    assert outm.shape == xm.shape
    assert jnp.allclose(outm, ref_swish(xm), atol=1e-5, rtol=1e-5)

    print("KERNEL_OK")
</pallas_src>

<mosaic_0001>
module attributes {stable_mosaic.version = 11 : i64} {
  func.func @_swish_kernel(%arg0: i32, %arg1: i32, %arg2: memref<8x256xf32, #tpu.memory_space<vmem>>, %arg3: memref<8x256xf32, #tpu.memory_space<vmem>>) attributes {dimension_semantics = [#tpu.dimension_semantics<parallel>, #tpu.dimension_semantics<parallel>], iteration_bounds = array<i64: 1, 1>, scalar_prefetch = 0 : i64, scratch_operands = 0 : i64, tpu.core_type = #tpu.core_type<tc>, window_params = [{transform_indices = @transform_0, window_bounds = array<i64: 8, 256>}, {transform_indices = @transform_1, window_bounds = array<i64: 8, 256>}]} {
    %c0 = arith.constant 0 : index
    %c0_0 = arith.constant 0 : index
    %0 = vector.load %arg2[%c0, %c0_0] : memref<8x256xf32, #tpu.memory_space<vmem>>, vector<8x256xf32>
    %cst = arith.constant 5.000000e-01 : f32
    %1 = vector.broadcast %cst : f32 to vector<8x256xf32>
    %2 = arith.mulf %1, %0 : vector<8x256xf32>
    %3 = math.tanh %2 : vector<8x256xf32>
    %cst_1 = arith.constant 5.000000e-01 : f32
    %4 = vector.broadcast %cst_1 : f32 to vector<8x256xf32>
    %5 = arith.mulf %4, %3 : vector<8x256xf32>
    %cst_2 = arith.constant 5.000000e-01 : f32
    %6 = vector.broadcast %cst_2 : f32 to vector<8x256xf32>
    %7 = arith.addf %5, %6 : vector<8x256xf32>
    %8 = arith.mulf %0, %7 : vector<8x256xf32>
    %c0_3 = arith.constant 0 : index
    %c0_4 = arith.constant 0 : index
    %9 = vector.load %arg3[%c0_3, %c0_4] : memref<8x256xf32, #tpu.memory_space<vmem>>, vector<8x256xf32>
    tpu.vector_store %arg3[%c0_3, %c0_4], %8 {strides = array<i32>} : memref<8x256xf32, #tpu.memory_space<vmem>>, vector<8x256xf32>,
    return
  }
  func.func @transform_0(%arg0: i32, %arg1: i32) -> (i32, i32) {
    %c0_i32 = arith.constant 0 : i32
    return %arg0, %arg1 : i32, i32
  }
  func.func @transform_1(%arg0: i32, %arg1: i32) -> (i32, i32) {
    %c0_i32 = arith.constant 0 : i32
    return %arg0, %arg1 : i32, i32
  }
}

</mosaic_0001>

<llo_original>
// kernel: swish.1
$region0: #{swish.1}
  #allocation0 [shape = 'u32[]', space=smem, size = 0x4, offset = 0x4, fixed_abs, tag = 'smem constant byte address 0x4 - core index']
  #allocation1 [shape = 'u32[144,128]{1,0:T(1,128)}', space=vmem, size = 0x12000, scoped, tag = 'internal scratch']
  %s0 = inlined_call_operand.vmem [shape: f32[8,256], index: 0, kind: input, shape index: {}]
  %s1 = inlined_call_operand.vmem [shape: f32[8,256], index: 1, kind: output, shape index: {}]
  %s2 = sld [smem:[#allocation0]]
  $region14: #{swish.1} parent=0
    _
  %s4 = ssub.s32 1, %s2
  %s5 = scalar_select 0, %s4, %s2
  // Predicated region
  $region2: #{swish.1} parent=0 // pred_check
    _
  $region3: #{swish.1} parent=0 // pred_check_branch
    %7 = sbr.rel (0) target = $region5
  $region4: #{swish.1} parent=0 // pred_region
    _
  $region5: #{swish.1} parent=0 // pred_fallthru
    _
  %v8 = vld [vmem:[%s0] sm:$0xff]
  %v9 = vld [vmem:[%s0 + $0x8] sm:$0xff]
  %v10 = vmul.f32 %v8, 0.5
  %v11 = vmul.f32 %v9, 0.5
  %v12 = vtanh.pop %v10
  %v13 = vtanh.pop %v11
  %v14 = vmul.f32 %v12, 0.5
  %v15 = vmul.f32 %v13, 0.5
  %v16 = vadd.f32 %v14, 0.5
  %v17 = vadd.f32 %v15, 0.5
  %v18 = vmul.f32 %v8, %v16
  %v19 = vmul.f32 %v9, %v17
  %20 = vst [vmem:[%s1] sm:$0xff] %v18
  %21 = vst [vmem:[%s1 + $0x8] sm:$0xff] %v19
  // Predicated region
  $region6: #{swish.1} parent=0 // pred_check
    _
  $region7: #{swish.1} parent=0 // pred_check_branch
    %23 = sbr.rel (0) target = $region9
  $region8: #{swish.1} parent=0 // pred_region
    _
  $region9: #{swish.1} parent=0 // pred_fallthru
    _
  // Predicated region
  $region10: #{swish.1} parent=0 // pred_check
    _
  $region11: #{swish.1} parent=0 // pred_check_branch
    %25 = sbr.rel (0) target = $region13
  $region12: #{swish.1} parent=0 // pred_region
    _
  $region13: #{swish.1} parent=0 // pred_fallthru
    _

</llo_original>
